<compile_context>
chip_gen: v7x
topology: tpu7x:2x2x1
jax: 0.10.0
libtpu: 0.0.40
codegen_flags: <defaults>
</compile_context>

<pallas_src>
import jax
import jax.numpy as jnp
from jax.experimental import pallas as pl
from jax.experimental.pallas import tpu as pltpu


def _round_up(v, m):
    return (v + m - 1) // m * m


# ----------------------------------------------------------------------------
# Kernel 1: furthest point sampling (one batch element per grid step)
# ----------------------------------------------------------------------------
def _fps_kernel(xyz_smem_ref, xyz_ref, inds_ref, mind_ref):
    """One grid step == one batch element.

    xyz_smem_ref: (B*3, Np)      f32, whole array in SMEM (scalar centroid reads)
    xyz_ref     : (1, 3, 8, Np/8) f32 VMEM block (sublane/lane-dense layout)
    inds_ref    : (B, S)          i32, whole array in SMEM (scalar writes)
    mind_ref    : (8, Np/8)       f32 VMEM scratch (running min sq. distance)
    """
    b = pl.program_id(0)
    n8 = xyz_ref.shape[3]
    n = 8 * n8
    s = inds_ref.shape[1]

    # Bits needed to encode a point index; the low idx_bits of the distance
    # key are sacrificed to carry the (inverted) index for the tie-break.
    idx_bits = max(1, (n - 1).bit_length())
    idx_mask = (1 << idx_bits) - 1
    hi_mask = jnp.int32(~idx_mask)

    mind_ref[...] = jnp.full((8, n8), 1e10, jnp.float32)
    row = b * 3

    def body(i, far):
        # Record the currently-selected farthest point: one scalar SMEM store.
        inds_ref[b, i] = far
        # Centroid coordinates: 3 scalar SMEM loads (no masked reductions).
        cx = xyz_smem_ref[row + 0, far]
        cy = xyz_smem_ref[row + 1, far]
        cz = xyz_smem_ref[row + 2, far]

        # Reload coordinate tiles every iteration (bounds vreg live ranges at
        # large N; rides spare vld slots, off the serial chain).
        x = xyz_ref[0, 0]   # (8, n8)
        y = xyz_ref[0, 1]
        z = xyz_ref[0, 2]
        dx = x - cx
        dy = y - cy
        dz = z - cz
        d = dx * dx + dy * dy + dz * dz
        mind = jnp.minimum(mind_ref[...], d)
        mind_ref[...] = mind

        # Fused max-distance + smallest-index tie-break in ONE reduction:
        # d >= 0 so its int32 bit pattern is monotone; clear low idx_bits and
        # stuff (idx_mask - pid) there, then a single max gives the argmax.
        sub = jax.lax.broadcasted_iota(jnp.int32, (8, n8), 0)
        lane = jax.lax.broadcasted_iota(jnp.int32, (8, n8), 1)
        pid = sub * n8 + lane
        key = (pltpu.bitcast(mind, jnp.int32) & hi_mask) | (idx_mask - pid)
        kmax = jnp.max(key)
        far_new = (idx_mask - (kmax & idx_mask)).astype(jnp.int32)
        return far_new

    jax.lax.fori_loop(0, s, body, jnp.int32(0))


def furthest_point_sample(xyz_t, seed_num):
    """xyz_t: (B, 3, N) float32 -> (B, seed_num) int32 indices in [0, N)."""
    B, three, N = xyz_t.shape
    assert three == 3
    assert seed_num <= N

    # Pad point count to a multiple of 1024 so the (8, Np/8) layout is
    # lane-dense (Np/8 is a multiple of 128).  Padding points duplicate
    # point 0: they can never strictly exceed point 0's running distance and
    # lose every tie (larger index), so they are never selected.
    n_pad = _round_up(max(N, 1024), 1024)
    if n_pad != N:
        pad = jnp.broadcast_to(xyz_t[:, :, :1], (B, 3, n_pad - N))
        xyz_t = jnp.concatenate([xyz_t, pad], axis=2)
    n8 = n_pad // 8

    xyz_dense = xyz_t.reshape(B, 3, 8, n8)    # lane-dense VMEM layout
    xyz_flat = xyz_t.reshape(B * 3, n_pad)    # SMEM copy for scalar gathers

    out = pl.pallas_call(
        _fps_kernel,
        out_shape=jax.ShapeDtypeStruct((B, seed_num), jnp.int32),
        grid=(B,),
        in_specs=[
            pl.BlockSpec(memory_space=pltpu.MemorySpace.SMEM),
            pl.BlockSpec((1, 3, 8, n8), lambda b: (b, 0, 0, 0)),
        ],
        # Unblocked SMEM output: one scalar store per FPS iteration; grid axis
        # must therefore be "arbitrary" (output is resident across steps).
        out_specs=pl.BlockSpec(memory_space=pltpu.MemorySpace.SMEM),
        scratch_shapes=[pltpu.VMEM((8, n8), jnp.float32)],
        compiler_params=pltpu.CompilerParams(
            dimension_semantics=("arbitrary",)),
    )(xyz_flat, xyz_dense)
    return out


# ----------------------------------------------------------------------------
# Kernel 2: per-seed-point MLP (stand-in for MinkUNet, same output shape),
# writing the transposed (C_out, seeds) layout directly.
# ----------------------------------------------------------------------------
def _seed_mlp_kernel(x_ref, w1_ref, b1_ref, w2_ref, b2_ref, o_ref):
    x = x_ref[0]                                              # (tm, cin_p) bf16
    h = jnp.dot(x, w1_ref[...], preferred_element_type=jnp.float32)
    h = jnp.maximum(h + b1_ref[...], 0.0)
    o = jnp.dot(h.astype(jnp.bfloat16), w2_ref[...],
                preferred_element_type=jnp.float32)
    o = o + b2_ref[...]                                       # (tm, cout) f32
    # In-kernel transpose (rides XLU slots); output block stays lane-dense.
    o_ref[0] = o.T.astype(o_ref.dtype)                        # (cout, tm)


def seed_mlp_forward(seed_feats, w1, b1, w2, b2, *, tm=512):
    """seed_feats: (B, S, Cin) f32 -> (B, Cout, S) f32 (already transposed)."""
    B, S, cin = seed_feats.shape
    hidden = w1.shape[1]
    cout = w2.shape[1]

    # Pad the tiny contraction dim up to a sublane multiple.
    cin_p = max(8, _round_up(cin, 8))
    x = seed_feats
    if cin_p != cin:
        x = jnp.pad(x, ((0, 0), (0, 0), (0, cin_p - cin)))
        w1 = jnp.pad(w1, ((0, cin_p - cin), (0, 0)))

    # Large row tiles (grid-step-overhead bound otherwise).
    tm = min(tm, _round_up(S, 128))
    s_p = _round_up(S, tm)
    if s_p != S:
        x = jnp.pad(x, ((0, 0), (0, s_p - S), (0, 0)))

    xb = x.astype(jnp.bfloat16)
    w1b = w1.astype(jnp.bfloat16)
    w2b = w2.astype(jnp.bfloat16)

    out = pl.pallas_call(
        _seed_mlp_kernel,
        out_shape=jax.ShapeDtypeStruct((B, cout, s_p), jnp.float32),
        grid=(B, s_p // tm),
        in_specs=[
            pl.BlockSpec((1, tm, cin_p), lambda b, i: (b, i, 0)),
            pl.BlockSpec((cin_p, hidden), lambda b, i: (0, 0)),
            pl.BlockSpec((1, hidden), lambda b, i: (0, 0)),
            pl.BlockSpec((hidden, cout), lambda b, i: (0, 0)),
            pl.BlockSpec((1, cout), lambda b, i: (0, 0)),
        ],
        out_specs=pl.BlockSpec((1, cout, tm), lambda b, i: (b, 0, i)),
        compiler_params=pltpu.CompilerParams(
            dimension_semantics=("parallel", "parallel")),
    )(xb, w1b, b1, w2b, b2)
    return out[:, :, :S]


# ----------------------------------------------------------------------------
# Backbone wrapper (glue in plain JAX)
# ----------------------------------------------------------------------------
def init_params(key, input_feature_dim, hidden, out_channels):
    k1, k2 = jax.random.split(key)
    w1 = jax.random.normal(k1, (input_feature_dim, hidden), jnp.float32) * 0.1
    b1 = jnp.zeros((1, hidden), jnp.float32)
    w2 = jax.random.normal(k2, (hidden, out_channels), jnp.float32) * 0.1
    b2 = jnp.zeros((1, out_channels), jnp.float32)
    return dict(w1=w1, b1=b1, w2=w2, b2=b2)


def minkunet_backbone_forward(pointcloud, params, seed_num, out_channels):
    """pointcloud: (B, N, 3 + input_feature_dim) float32."""
    B, N, _ = pointcloud.shape
    # _break_up_pc + permute(0, 2, 1): xyz (B,N,3), features (B,N,F)
    xyz = pointcloud[..., 0:3]
    features = pointcloud[..., 3:]

    # Furthest point sampling on xyz (Pallas kernel).
    xyz_t = jnp.transpose(xyz, (0, 2, 1))            # (B, 3, N)
    inds = furthest_point_sample(xyz_t, seed_num)    # (B, S) int32

    # Gather seed coordinates / features at the sampled indices.
    # TODO(synk): the feature gather could be fused into the MLP kernel via
    # scalar-prefetched indices; at these shapes the copy is tiny.
    seed_xyz = jnp.take_along_axis(xyz, inds[..., None], axis=1)         # (B,S,3)
    seed_feats = jnp.take_along_axis(features, inds[..., None], axis=1)  # (B,S,F)

    # TODO(synk): real MinkUNet sparse convolutions not translatable; per-point
    # MLP (tiled Pallas matmul kernel) stands in.  bf16 MXU operands deviate
    # slightly from the f32 torch reference (acceptable tolerance tradeoff).
    fp2_features = seed_mlp_forward(
        seed_feats, params["w1"], params["b1"], params["w2"], params["b2"]
    )  # (B, out_channels, S) -- transposed layout produced in-kernel

    end_points = {}
    end_points["fp2_features"] = fp2_features
    end_points["fp2_xyz"] = seed_xyz
    # torch uses .long() (int64); JAX default x64 is off so we keep int32.
    end_points["fp2_inds"] = inds
    return end_points


# ----------------------------------------------------------------------------
if __name__ == "__main__":
    key = jax.random.PRNGKey(0)
    kp, kd = jax.random.split(key)

    # Small shapes consistent with the module's forward (module defaults are
    # seed_num=1024 / out_channels=256; we keep out_channels=256 and shrink
    # N / seed_num; N is a multiple of 1024 so the FPS layout is lane-dense
    # and seed_num a multiple of 128).
    B = 2
    N = 1024
    INPUT_FEATURE_DIM = 3
    SEED_NUM = 256
    OUT_CHANNELS = 256
    HIDDEN = 256

    pointcloud = jax.random.normal(kd, (B, N, 3 + INPUT_FEATURE_DIM), jnp.float32)
    params = init_params(kp, INPUT_FEATURE_DIM, HIDDEN, OUT_CHANNELS)

    end_points = minkunet_backbone_forward(pointcloud, params, SEED_NUM, OUT_CHANNELS)
    jax.block_until_ready(end_points)

    assert end_points["fp2_features"].shape == (B, OUT_CHANNELS, SEED_NUM)
    assert end_points["fp2_xyz"].shape == (B, SEED_NUM, 3)
    assert end_points["fp2_inds"].shape == (B, SEED_NUM)
    inds_host = jax.device_get(end_points["fp2_inds"])
    assert (inds_host >= 0).all() and (inds_host < N).all()
    # FPS never re-selects a point while distinct points remain.
    for b in range(B):
        assert len(set(inds_host[b].tolist())) == SEED_NUM
    print("KERNEL_OK")
</pallas_src>

<mosaic_0001>
module attributes {stable_mosaic.version = 11 : i64} {
  func.func @_fps_kernel(%arg0: i32, %arg1: memref<6x1024xf32, #tpu.memory_space<smem>>, %arg2: memref<1x3x8x128xf32, #tpu.memory_space<vmem>>, %arg3: memref<2x256xi32, #tpu.memory_space<smem>>, %arg4: memref<8x128xf32, #tpu.memory_space<vmem>>) attributes {dimension_semantics = [#tpu.dimension_semantics<arbitrary>], iteration_bounds = array<i64: 2>, scalar_prefetch = 0 : i64, scratch_operands = 1 : i64, tpu.core_type = #tpu.core_type<tc>, window_params = [{transform_indices = @transform_0, window_bounds = array<i64: 6, 1024>}, {transform_indices = @transform_1, window_bounds = array<i64: 1, 3, 8, 128>}, {transform_indices = @transform_2, window_bounds = array<i64: 2, 256>}]} {
    %cst = arith.constant 1.000000e+10 : f32
    %0 = vector.broadcast %cst : f32 to vector<8x128xf32>
    %c0 = arith.constant 0 : index
    %c0_0 = arith.constant 0 : index
    %1 = vector.load %arg4[%c0, %c0_0] : memref<8x128xf32, #tpu.memory_space<vmem>>, vector<8x128xf32>
    tpu.vector_store %arg4[%c0, %c0_0], %0 {strides = array<i32>} : memref<8x128xf32, #tpu.memory_space<vmem>>, vector<8x128xf32>,
    %c3_i32 = arith.constant 3 : i32
    %2 = arith.muli %arg0, %c3_i32 : i32
    %c-1024_i32 = arith.constant -1024 : i32
    %c0_i32 = arith.constant 0 : i32
    %c0_i32_1 = arith.constant 0 : i32
    %c256_i32 = arith.constant 256 : i32
    %3 = arith.addi %c0_i32_1, %c256_i32 : i32
    %c1_i32 = arith.constant 1 : i32
    %4 = scf.for %arg5 = %c0_i32_1 to %3 step %c1_i32 iter_args(%arg6 = %c0_i32) -> (i32)  : i32 {
      %5 = arith.index_cast %arg0 : i32 to index
      %6 = arith.index_cast %arg5 : i32 to index
      %7 = memref.load %arg3[%5, %6] : memref<2x256xi32, #tpu.memory_space<smem>>
      memref.store %arg6, %arg3[%5, %6] : memref<2x256xi32, #tpu.memory_space<smem>>
      %c0_i32_3 = arith.constant 0 : i32
      %8 = arith.addi %2, %c0_i32_3 : i32
      %9 = arith.index_cast %8 : i32 to index
      %10 = arith.index_cast %arg6 : i32 to index
      %11 = memref.load %arg1[%9, %10] : memref<6x1024xf32, #tpu.memory_space<smem>>
      %c1_i32_4 = arith.constant 1 : i32
      %12 = arith.addi %2, %c1_i32_4 : i32
      %13 = arith.index_cast %12 : i32 to index
      %14 = arith.index_cast %arg6 : i32 to index
      %15 = memref.load %arg1[%13, %14] : memref<6x1024xf32, #tpu.memory_space<smem>>
      %c2_i32 = arith.constant 2 : i32
      %16 = arith.addi %2, %c2_i32 : i32
      %17 = arith.index_cast %16 : i32 to index
      %18 = arith.index_cast %arg6 : i32 to index
      %19 = memref.load %arg1[%17, %18] : memref<6x1024xf32, #tpu.memory_space<smem>>
      %c0_5 = arith.constant 0 : index
      %c0_6 = arith.constant 0 : index
      %c0_7 = arith.constant 0 : index
      %c0_8 = arith.constant 0 : index
      %20 = vector.load %arg2[%c0_5, %c0_6, %c0_7, %c0_8] : memref<1x3x8x128xf32, #tpu.memory_space<vmem>>, vector<1x1x8x128xf32>
      %21 = vector.shape_cast %20 : vector<1x1x8x128xf32> to vector<8x128xf32>
      %c0_9 = arith.constant 0 : index
      %c1 = arith.constant 1 : index
      %c0_10 = arith.constant 0 : index
      %c0_11 = arith.constant 0 : index
      %22 = vector.load %arg2[%c0_9, %c1, %c0_10, %c0_11] : memref<1x3x8x128xf32, #tpu.memory_space<vmem>>, vector<1x1x8x128xf32>
      %23 = vector.shape_cast %22 : vector<1x1x8x128xf32> to vector<8x128xf32>
      %c0_12 = arith.constant 0 : index
      %c2 = arith.constant 2 : index
      %c0_13 = arith.constant 0 : index
      %c0_14 = arith.constant 0 : index
      %24 = vector.load %arg2[%c0_12, %c2, %c0_13, %c0_14] : memref<1x3x8x128xf32, #tpu.memory_space<vmem>>, vector<1x1x8x128xf32>
      %25 = vector.shape_cast %24 : vector<1x1x8x128xf32> to vector<8x128xf32>
      %26 = vector.broadcast %11 : f32 to vector<8x128xf32>
      %27 = arith.subf %21, %26 : vector<8x128xf32>
      %28 = vector.broadcast %15 : f32 to vector<8x128xf32>
      %29 = arith.subf %23, %28 : vector<8x128xf32>
      %30 = vector.broadcast %19 : f32 to vector<8x128xf32>
      %31 = arith.subf %25, %30 : vector<8x128xf32>
      %32 = arith.mulf %27, %27 : vector<8x128xf32>
      %33 = arith.mulf %29, %29 : vector<8x128xf32>
      %34 = arith.addf %32, %33 : vector<8x128xf32>
      %35 = arith.mulf %31, %31 : vector<8x128xf32>
      %36 = arith.addf %34, %35 : vector<8x128xf32>
      %c0_15 = arith.constant 0 : index
      %c0_16 = arith.constant 0 : index
      %37 = vector.load %arg4[%c0_15, %c0_16] : memref<8x128xf32, #tpu.memory_space<vmem>>, vector<8x128xf32>
      %38 = arith.minimumf %37, %36 : vector<8x128xf32>
      %c0_17 = arith.constant 0 : index
      %c0_18 = arith.constant 0 : index
      %39 = vector.load %arg4[%c0_17, %c0_18] : memref<8x128xf32, #tpu.memory_space<vmem>>, vector<8x128xf32>
      tpu.vector_store %arg4[%c0_17, %c0_18], %38 {strides = array<i32>} : memref<8x128xf32, #tpu.memory_space<vmem>>, vector<8x128xf32>,
      %40 = tpu.iota {dimensions = array<i32: 0>} : vector<8x128xi32>
      %41 = tpu.iota {dimensions = array<i32: 1>} : vector<8x128xi32>
      %c128_i32 = arith.constant 128 : i32
      %42 = vector.broadcast %c128_i32 : i32 to vector<8x128xi32>
      %43 = arith.muli %40, %42 : vector<8x128xi32>
      %44 = arith.addi %43, %41 : vector<8x128xi32>
      %45 = tpu.bitcast %38 : vector<8x128xf32> -> vector<8x128xi32>
      %46 = vector.broadcast %c-1024_i32 : i32 to vector<8x128xi32>
      %47 = arith.andi %45, %46 : vector<8x128xi32>
      %c1023_i32 = arith.constant 1023 : i32
      %48 = vector.broadcast %c1023_i32 : i32 to vector<8x128xi32>
      %49 = arith.subi %48, %44 : vector<8x128xi32>
      %50 = arith.ori %47, %49 : vector<8x128xi32>
      %51 = vector.shape_cast %50 : vector<8x128xi32> to vector<1x8x128xi32>
      %cst_19 = arith.constant dense<-2147483648> : vector<1xi32>
      %52 = vector.multi_reduction <maxsi>, %51, %cst_19 [1, 2] : vector<1x8x128xi32> to vector<1xi32>
      %53 = vector.shape_cast %52 : vector<1xi32> to vector<1x1x1xi32>
      %54 = vector.extract %53[0, 0, 0] : i32 from vector<1x1x1xi32>
      %c1023_i32_20 = arith.constant 1023 : i32
      %55 = arith.andi %54, %c1023_i32_20 : i32
      %c1023_i32_21 = arith.constant 1023 : i32
      %56 = arith.subi %c1023_i32_21, %55 : i32
      scf.yield %56 : i32
    }
    %c256_i32_2 = arith.constant 256 : i32
    return
  }
  func.func @transform_0(%arg0: i32) -> (i32, i32) {
    %c0_i32 = arith.constant 0 : i32
    %c0_i32_0 = arith.constant 0 : i32
    %c0_i32_1 = arith.constant 0 : i32
    return %c0_i32, %c0_i32_0 : i32, i32
  }
  func.func @transform_1(%arg0: i32) -> (i32, i32, i32, i32) {
    %c0_i32 = arith.constant 0 : i32
    %c0_i32_0 = arith.constant 0 : i32
    %c0_i32_1 = arith.constant 0 : i32
    %c0_i32_2 = arith.constant 0 : i32
    return %arg0, %c0_i32, %c0_i32_0, %c0_i32_1 : i32, i32, i32, i32
  }
  func.func @transform_2(%arg0: i32) -> (i32, i32) {
    %c0_i32 = arith.constant 0 : i32
    %c0_i32_0 = arith.constant 0 : i32
    %c0_i32_1 = arith.constant 0 : i32
    return %c0_i32, %c0_i32_0 : i32, i32
  }
}

</mosaic_0001>

<llo_original>
// kernel: tpu_custom_call.1
$region0: #{tpu_custom_call.1}
  #allocation0 [shape = 'u32[]', space=smem, size = 0x4, offset = 0x4, fixed_abs, tag = 'smem constant byte address 0x4 - core index']
  #allocation1 [shape = 'u32[144,128]{1,0:T(1,128)}', space=vmem, size = 0x12000, scoped, tag = 'internal scratch']
  #allocation2 [shape = 'f32[8,128]{1,0:T(8,128)}', space=vmem, size = 0x1000, scoped, tag = 'scratch operand']
  %s0 = inlined_call_operand.hbm [shape: f32[6,1024], index: 0, kind: input, shape index: {}]
  %s1 = inlined_call_operand.hbm [shape: f32[2,3,8,128], index: 1, kind: input, shape index: {}]
  %s2 = inlined_call_operand.hbm [shape: s32[2,256], index: 2, kind: output, shape index: {}]
  %s3 = sld [smem:[#allocation0]]
  $region56: #{tpu_custom_call.1} parent=0
    _
  %s5 = ssub.s32 1, %s3
  %s6 = scalar_select 0, %s5, %s3
  $region1: #{tpu_custom_call.1} parent=0
    #allocation3 [shape = 'u8[32768]{0}', space=smem, size = 0x8000, scoped, tag = 'input window, operand 0, single buffered']
    #allocation4 [shape = 's32[2]{0}', space=sflag, size = 0x8, scoped, tag = 'scoped memory for tpu_custom_call.1']
    #allocation5 [shape = 's32[2]{0}', space=sflag, size = 0x8, scoped, tag = 'scoped memory for tpu_custom_call.1']
    #allocation6 [shape = 's32[2]{0}', space=sflag, size = 0x8, scoped, tag = 'scoped memory for tpu_custom_call.1']
    #allocation7 [shape = 'u8[24576]{0}', space=vmem, size = 0x6000, scoped, tag = 'input window, operand 1']
    #allocation8 [shape = 'u8[2048]{0}', space=smem, size = 0x800, scoped, tag = 'output window, operand 0, single buffered']
    %7 = vsyncpa [#allocation5], 0
    %8 = vsyncpa [#allocation4], 0
    %s9 = scalar_lea.sflag [#allocation4], 1
    %10 = vsyncpa %s9, 0
    %11 = vsyncpa [#allocation6], 0
    loop: start=0, step=1, limit=4
    $region2: #{tpu_custom_call.1} parent=1 // loop_pre_header
      _
    $region3: #{tpu_custom_call.1} parent=1 // loop_header
      %s13 = sphi 0, %s17
      %p14 = scmp.ge.s32.totalorder %s13, 4
      %s21 = sphi 0, %s21
      %s23 = sphi 0, %s21
      %s24 = sphi 0, %s23
      %s38 = sphi 0, %s24
      %s44 = sphi 0, %s46
      %s47 = sphi 0, %s44
      %s48 = sphi 0, %s47
      %s64 = sphi 0, %s48
      %s68 = sphi 0, %s68
      %s70 = sphi 0, %s68
      %s71 = sphi 0, %s70
      %s85 = sphi 0, %s71
    $region4: #{tpu_custom_call.1} parent=1 // loop_header_branch
      %16 = sbr.rel (%p14) target = $region8
    $region5: #{tpu_custom_call.1} parent=1 // loop_body
      %s18 = ssub.s32 %s13, 1
      %s19 = ssub.s32 %s13, 2
      %s20 = sadd.s32 %s13, 1
      %s22 = sadd.s32 %s21, 1
      %p25 = scmp.eq.s32.totalorder %s13, 1
      %p26 = scmp.ne.s32.totalorder %s21, %s23
      %p27 = scmp.eq.s32.totalorder %s13, 0
      %p28 = por %p26, %p27
      %p29 = scmp.ne.s32.totalorder %s21, %s23
      %p30 = scmp.eq.s32.totalorder %s18, 1
      %p31 = por %p29, %p30
      %p32 = scmp.ne.s32.totalorder %s23, %s24
      %p33 = scmp.eq.s32.totalorder %s18, 0
      %p34 = por %p32, %p33
      %p35 = scmp.ne.s32.totalorder %s23, %s24
      %p36 = scmp.eq.s32.totalorder %s19, 1
      %p37 = por %p35, %p36
      %p39 = scmp.ne.s32.totalorder %s24, %s38
      %p40 = scmp.eq.s32.totalorder %s19, 0
      %p41 = por %p39, %p40
      %s42 = ssub.s32 %s13, %s20
      %p43 = scmp.eq.s32.totalorder %s42, 0
      %s45 = sadd.s32 %s44, 1
      %s46 = scalar_select %p43, %s44, %s45
      %p49 = pneg %p43
      %p50 = scmp.eq.s32.totalorder %s13, 1
      %p51 = por %p49, %p50
      %p52 = scmp.ne.s32.totalorder %s44, %s47
      %p53 = scmp.eq.s32.totalorder %s13, 0
      %p54 = por %p52, %p53
      %p55 = scmp.ne.s32.totalorder %s44, %s47
      %p56 = scmp.eq.s32.totalorder %s18, 1
      %p57 = por %p55, %p56
      %p58 = scmp.ne.s32.totalorder %s47, %s48
      %p59 = scmp.eq.s32.totalorder %s18, 0
      %p60 = por %p58, %p59
      %p61 = scmp.ne.s32.totalorder %s47, %s48
      %p62 = scmp.eq.s32.totalorder %s19, 1
      %p63 = por %p61, %p62
      %p65 = scmp.ne.s32.totalorder %s48, %s64
      %p66 = scmp.eq.s32.totalorder %s19, 0
      %p67 = por %p65, %p66
      %s69 = sadd.s32 %s68, 1
      %p72 = scmp.eq.s32.totalorder %s13, 1
      %p73 = scmp.ne.s32.totalorder %s68, %s70
      %p74 = scmp.eq.s32.totalorder %s13, 0
      %p75 = por %p73, %p74
      %p76 = scmp.ne.s32.totalorder %s68, %s70
      %p77 = scmp.eq.s32.totalorder %s18, 1
      %p78 = por %p76, %p77
      %p79 = scmp.ne.s32.totalorder %s70, %s71
      %p80 = scmp.eq.s32.totalorder %s18, 0
      %p81 = por %p79, %p80
      %p82 = scmp.ne.s32.totalorder %s70, %s71
      %p83 = scmp.eq.s32.totalorder %s19, 1
      %p84 = por %p82, %p83
      %p86 = scmp.ne.s32.totalorder %s71, %s85
      %p87 = scmp.eq.s32.totalorder %s19, 0
      %p88 = por %p86, %p87
      %p89 = scmp.le.s32.totalorder 1, %s13
      %p90 = scmp.lt.s32.totalorder %s13, 3
      %p91 = pnand %p89, %p90
      %p92 = pneg %p91
      // Predicated region
      $region9: #{tpu_custom_call.1} parent=5 // pred_check
        _
      $region10: #{tpu_custom_call.1} parent=5 // pred_check_branch
        %94 = sbr.rel (%p91) target = $region12
      $region11: #{tpu_custom_call.1} parent=5 // pred_region
        %s95 = ssub.s32 %s13, 1
        // Predicated region
        $region13: #{tpu_custom_call.1} parent=11 // pred_check
          %p96 = pneg %p34
        $region14: #{tpu_custom_call.1} parent=11 // pred_check_branch
          %98 = sbr.rel (%p96) target = $region16
        $region15: #{tpu_custom_call.1} parent=11 // pred_region
          %s100 = ssub.s32 1024, 1024
          %101 = vsyncadd [#allocation5], %s100
          %104 = dma.hbm_to_smem %s0, 1024, [#allocation3], [#allocation5]
        $region16: #{tpu_custom_call.1} parent=11 // pred_fallthru
          _
      $region12: #{tpu_custom_call.1} parent=5 // pred_fallthru
        _
      %p105 = scmp.lt.s32.totalorder %s13, 2
      // Predicated region
      $region17: #{tpu_custom_call.1} parent=5 // pred_check
        %p106 = pneg %p105
      $region18: #{tpu_custom_call.1} parent=5 // pred_check_branch
        %108 = sbr.rel (%p106) target = $region20
      $region19: #{tpu_custom_call.1} parent=5 // pred_region
        // Predicated region
        $region21: #{tpu_custom_call.1} parent=19 // pred_check
          %p109 = pneg %p54
        $region22: #{tpu_custom_call.1} parent=19 // pred_check_branch
          %111 = sbr.rel (%p109) target = $region24
        $region23: #{tpu_custom_call.1} parent=19 // pred_region
          %s112 = sand.u32 %s44, 1
          %s113 = scalar_lea.sflag [#allocation4], %s112
          %s114 = sand.u32 %s44, 1
          %s115 = smul.addr %s114, 24
          %s116 = scalar_lea.vmem [#allocation7], %s115
          %s118 = ssub.s32 384, 384
          %119 = vsyncadd %s113, %s118
          %s120 = smul.addr %s13, 3
          %s121 = smul.addr %s120, 128
          %s122 = scalar_lea.hbm %s1, %s121
          %s123 = sshll.u32 %s116, 4
          %s124 = int_to_ptr.vmem [resolvable:$true] %s123
          %129 = dma.hbm_to_vmem [thread:$0]  %s122, 384, %s124, %s113, 128, 128, 8
        $region24: #{tpu_custom_call.1} parent=19 // pred_fallthru
          _
      $region20: #{tpu_custom_call.1} parent=5 // pred_fallthru
        _
      %p130 = scmp.le.s32.totalorder 1, %s13
      %p131 = scmp.lt.s32.totalorder %s13, 3
      %p132 = pnand %p130, %p131
      %p133 = pneg %p132
      // Predicated region
      $region25: #{tpu_custom_call.1} parent=5 // pred_check
        _
      $region26: #{tpu_custom_call.1} parent=5 // pred_check_branch
        %135 = sbr.rel (%p132) target = $region28
      $region27: #{tpu_custom_call.1} parent=5 // pred_region
        %s136 = ssub.s32 %s13, 1
        // Predicated region
        $region29: #{tpu_custom_call.1} parent=27 // pred_check
          %p137 = pneg %p34
        $region30: #{tpu_custom_call.1} parent=27 // pred_check_branch
          %139 = sbr.rel (%p137) target = $region32
        $region31: #{tpu_custom_call.1} parent=27 // pred_region
          %140 = dma.done [#allocation5], 1024
        $region32: #{tpu_custom_call.1} parent=27 // pred_fallthru
          _
        %s141 = sand.u32 %s47, 1
        %s142 = scalar_lea.sflag [#allocation4], %s141
        %s143 = sand.u32 %s47, 1
        %s144 = smul.addr %s143, 24
        %s145 = scalar_lea.vmem [#allocation7], %s144
        // Predicated region
        $region33: #{tpu_custom_call.1} parent=27 // pred_check
          %p146 = pneg %p60
        $region34: #{tpu_custom_call.1} parent=27 // pred_check_branch
          %148 = sbr.rel (%p146) target = $region36
        $region35: #{tpu_custom_call.1} parent=27 // pred_region
          %149 = dma.done %s142, 384
        $region36: #{tpu_custom_call.1} parent=27 // pred_fallthru
          _
        %150 = sfence
        %p151 = pneg %p34
        %p152 = pneg %p31
        %s153 = sand.u32 %s47, 1
        %s154 = scalar_lea.sflag [#allocation4], %s153
        %s155 = sand.u32 %s47, 1
        %s156 = smul.addr %s155, 24
        %s157 = scalar_lea.vmem [#allocation7], %s156
        %p158 = pneg %p60
        %p159 = pneg %p57
        %p160 = pneg %p81
        %p161 = pneg %p78
        %162 = vst [vmem:[#allocation2] sm:$0xff] 1e+10
        %s163 = smul.u32 %s18, 3
        loop: start=0, step=1, limit=256
        $region37: #{tpu_custom_call.1} parent=27 // loop_pre_header
          _
        $region38: #{tpu_custom_call.1} parent=27 // loop_header
          %s165 = sphi 0, %s169
          %p166 = scmp.ge.s32.totalorder %s165, 256
          %s170 = sphi 0, %s280
        $region39: #{tpu_custom_call.1} parent=27 // loop_header_branch
          %168 = sbr.rel (%p166) target = $region43
        $region40: #{tpu_custom_call.1} parent=27 // loop_body
          %s171 = sshra.s32 %s165, 7
          %s172 = sand.u32 %s165, 127
          %s173 = sshra.s32 %s18, 1
          %s174 = sand.u32 %s18, 1
          %s175 = smul.u32 %s173, 2
          %s176 = sadd.s32 %s171, %s175
          %s177 = smul.u32 %s176, 256
          %s178 = sshra.s32 %s18, 1
          %s179 = sand.u32 %s18, 1
          %s180 = sshra.s32 %s165, 7
          %s181 = sand.u32 %s165, 127
          %s182 = smul.u32 %s179, 128
          %s183 = sadd.s32 %s182, %s181
          %s184 = sadd.s32 %s177, %s183
          %s185 = scalar_lea.smem [#allocation8], %s184
          %186 = sst [smem:[%s185]] %s170
          %s187 = sshra.s32 %s170, 7
          %s188 = sand.u32 %s170, 127
          %s189 = sshra.s32 %s163, 3
          %s190 = sand.u32 %s163, 7
          %s191 = smul.u32 %s189, 8
          %s192 = sadd.s32 %s187, %s191
          %s193 = smul.u32 %s192, 1024
          %s194 = sshra.s32 %s163, 3
          %s195 = sand.u32 %s163, 7
          %s196 = sshra.s32 %s170, 7
          %s197 = sand.u32 %s170, 127
          %s198 = smul.u32 %s195, 128
          %s199 = sadd.s32 %s198, %s197
          %s200 = sadd.s32 %s193, %s199
          %s201 = sld [smem:[#allocation3 + %s200]]
          %s202 = sadd.s32 %s163, 1
          %s203 = sshra.s32 %s202, 3
          %s204 = sand.u32 %s202, 7
          %s205 = smul.u32 %s203, 8
          %s206 = sadd.s32 %s187, %s205
          %s207 = smul.u32 %s206, 1024
          %s208 = sshra.s32 %s202, 3
          %s209 = sand.u32 %s202, 7
          %s210 = smul.u32 %s209, 128
          %s211 = sadd.s32 %s210, %s197
          %s212 = sadd.s32 %s207, %s211
          %s213 = sld [smem:[#allocation3 + %s212]]
          %s214 = sadd.s32 %s163, 2
          %s215 = sshra.s32 %s214, 3
          %s216 = sand.u32 %s214, 7
          %s217 = smul.u32 %s215, 8
          %s218 = sadd.s32 %s187, %s217
          %s219 = smul.u32 %s218, 1024
          %s220 = sshra.s32 %s214, 3
          %s221 = sand.u32 %s214, 7
          %s222 = smul.u32 %s221, 128
          %s223 = sadd.s32 %s222, %s197
          %s224 = sadd.s32 %s219, %s223
          %s225 = sld [smem:[#allocation3 + %s224]]
          %v226 = vld [vmem:[%s145] sm:$0xff]
          %s227 = scalar_lea.vmem %s145, 8 [#allocation7]
          %v228 = vld [vmem:[%s227] sm:$0xff]
          %s229 = scalar_lea.vmem %s145, 16 [#allocation7]
          %v230 = vld [vmem:[%s229] sm:$0xff]
          %v231 = vstv %s201
          %v232 = vsub.f32 %v226, %v231
          %v233 = vstv %s213
          %v234 = vsub.f32 %v228, %v233
          %v235 = vstv %s225
          %v236 = vsub.f32 %v230, %v235
          %v237 = vmul.f32 %v232, %v232
          %v238 = vmul.f32 %v234, %v234
          %v239 = vadd.f32 %v237, %v238
          %v240 = vmul.f32 %v236, %v236
          %v241 = vadd.f32 %v239, %v240
          %v242 = vld [vmem:[#allocation2] sm:$0xff]
          %v243 = vmin.f32 %v242, %v241
          %244 = vst [vmem:[#allocation2] sm:$0xff] %v243
          %v245 = vlaneseq
          %v246 = vshrl.u32 %v245, 7
          %v247 = vlaneseq
          %v248 = vand.u32 %v247, 127
          %v249 = vmul.u32 %v246, 128
          %v250 = vadd.s32 %v249, %v248
          %v252 = vand.u32 %v243, 4294966272
          %v253 = vsub.s32 1023, %v250
          %v254 = vor.u32 %v252, %v253
          %v255 = vand.u32 %v254, 65535
          %v256 = vshra.s32 %v254, 16
          %v257 = vcvt.s32.f32 %v255
          %v258 = vcvt.s32.f32 %v256
          %259 = vmax.xlane.f32.xlu0 %v258
          %v260 = vpop.xlane.xlu0 %259
          %vm261 = vcmp.eq.f32.partialorder %v258, %v260
          %v262 = vsel %vm261, %v257, -inf
          %263 = vmax.xlane.f32.xlu0 %v262
          %v264 = vpop.xlane.xlu0 %263
          %v265 = vcvt.f32.s32 %v264
          %v266 = vcvt.f32.s32 %v260
          %v267 = vshll.u32 %v266, 16
          %v268 = vadd.s32 %v267, %v265
          %v269 = vrot.slane %v268, 4
          %vm270 = vcmp.gt.s32.totalorder %v268, %v269
          %v271 = vsel %vm270, %v268, %v269
          %v272 = vrot.slane %v271, 2
          %vm273 = vcmp.gt.s32.totalorder %v271, %v272
          %v274 = vsel %vm273, %v271, %v272
          %v275 = vrot.slane %v274, 1
          %vm276 = vcmp.gt.s32.totalorder %v274, %v275
          %v277 = vsel %vm276, %v274, %v275
          %s278 = vtos %v277
          %s279 = sand.u32 %s278, 1023
          %s280 = ssub.s32 1023, %s279
        $region41: #{tpu_custom_call.1} parent=27 // loop_footer
          %s169 = sadd.s32 1, %s165
        $region42: #{tpu_custom_call.1} parent=27 // loop_footer_branch
          %164 = sbr.rel target = $region38
        $region43: #{tpu_custom_call.1} parent=27 // loop_exit
          _
        // Predicated region
        $region44: #{tpu_custom_call.1} parent=27 // pred_check
          %p281 = pneg %p78
        $region45: #{tpu_custom_call.1} parent=27 // pred_check_branch
          %283 = sbr.rel (%p281) target = $region47
        $region46: #{tpu_custom_call.1} parent=27 // pred_region
          %s285 = ssub.s32 64, 64
          %286 = vsyncadd [#allocation6], %s285
          %289 = dma.smem_to_hbm [#allocation8], 64, %s2, [#allocation6]
        $region47: #{tpu_custom_call.1} parent=27 // pred_fallthru
          _
        // Predicated region
        $region48: #{tpu_custom_call.1} parent=27 // pred_check
          %p290 = pneg %p78
        $region49: #{tpu_custom_call.1} parent=27 // pred_check_branch
          %292 = sbr.rel (%p290) target = $region51
        $region50: #{tpu_custom_call.1} parent=27 // pred_region
          %293 = dma.done [#allocation6], 64
        $region51: #{tpu_custom_call.1} parent=27 // pred_fallthru
          _
        %294 = sfence
      $region28: #{tpu_custom_call.1} parent=5 // pred_fallthru
        _
      %p295 = scmp.le.s32.totalorder 2, %s13
      // Predicated region
      $region52: #{tpu_custom_call.1} parent=5 // pred_check
        %p296 = pneg %p295
      $region53: #{tpu_custom_call.1} parent=5 // pred_check_branch
        %298 = sbr.rel (%p296) target = $region55
      $region54: #{tpu_custom_call.1} parent=5 // pred_region
        %s299 = ssub.s32 %s13, 2
      $region55: #{tpu_custom_call.1} parent=5 // pred_fallthru
        _
    $region6: #{tpu_custom_call.1} parent=1 // loop_footer
      %s17 = sadd.s32 1, %s13
    $region7: #{tpu_custom_call.1} parent=1 // loop_footer_branch
      %12 = sbr.rel target = $region3
    $region8: #{tpu_custom_call.1} parent=1 // loop_exit
      _
    %300 = vsyncpa [#allocation4], 1
    %s301 = scalar_lea.sflag [#allocation4], 1
    %302 = vsyncpa %s301, 1
    %303 = vsyncpa [#allocation5], 1
    %s304 = scalar_lea.sflag [#allocation5], 1
    %305 = vsyncpa %s304, 1
    %306 = vsyncpa [#allocation6], 1
    %s307 = scalar_lea.sflag [#allocation6], 1
    %308 = vsyncpa %s307, 1

</llo_original>
